<compile_context>
chip_gen: v7x
topology: tpu7x:2x2x1
jax: 0.10.0
libtpu: 0.0.40
codegen_flags: <defaults>
</compile_context>

<pallas_src>
import jax
import jax.numpy as jnp
from jax.experimental import pallas as pl
from jax.experimental.pallas import tpu as pltpu


# ---------------------------------------------------------------------------
# Exact GELU (torch.nn.GELU() default, erf-based).  erf is evaluated with the
# Abramowitz & Stegun 7.1.26 rational approximation (max abs err ~1.5e-7),
# built only from ops guaranteed to lower in Mosaic (abs/exp/where/arith).
# ---------------------------------------------------------------------------
def _gelu_exact(x):
    z = x * 0.7071067811865476            # x / sqrt(2)
    az = jnp.abs(z)
    t = 1.0 / (1.0 + 0.3275911 * az)
    poly = t * (0.254829592
                + t * (-0.284496736
                       + t * (1.421413741
                              + t * (-1.453152027
                                     + t * 1.061405429))))
    erf_abs = 1.0 - poly * jnp.exp(-az * az)
    erf_z = jnp.where(z < 0.0, -erf_abs, erf_abs)
    return 0.5 * x * (1.0 + erf_z)


# ---------------------------------------------------------------------------
# Tiled linear kernel:  y = act(x @ W + b), accumulated in f32 over K tiles.
# ---------------------------------------------------------------------------
def _make_linear_kernel(activation):
    def kernel(x_ref, w_ref, b_ref, o_ref, acc_ref):
        k = pl.program_id(2)

        @pl.when(k == 0)
        def _init():
            acc_ref[...] = jnp.zeros_like(acc_ref)

        acc_ref[...] += jnp.dot(
            x_ref[...], w_ref[...], preferred_element_type=jnp.float32)

        @pl.when(k == pl.num_programs(2) - 1)
        def _finalize():
            out = acc_ref[...] + b_ref[...].astype(jnp.float32)
            if activation is not None:
                out = activation(out)
            o_ref[...] = out.astype(o_ref.dtype)

    return kernel


def _tile(dim, target, mult):
    """Largest legal block size <= target: a multiple of `mult` dividing `dim`,
    else the full dimension (full dims are always legal)."""
    if dim <= target:
        return dim
    t = (target // mult) * mult
    while t >= mult:
        if dim % t == 0:
            return t
        t -= mult
    return dim


def linear(x2d, w, b, *, activation=None,
           block_m=256, block_n=512, block_k=512):
    """x2d: (M, K), w: (K, N), b: (1, N)  ->  (M, N)."""
    M, K = x2d.shape
    K2, N = w.shape
    assert K == K2 and b.shape == (1, N)

    bm = _tile(M, block_m, 8)      # second-minor: multiple of 8 (or full M)
    bn = _tile(N, block_n, 128)    # minor:        multiple of 128 (or full N)
    bk = _tile(K, block_k, 128)    # minor of x / second-minor of w

    grid = (M // bm, N // bn, K // bk)

    return pl.pallas_call(
        _make_linear_kernel(activation),
        out_shape=jax.ShapeDtypeStruct((M, N), x2d.dtype),
        grid_spec=pltpu.PrefetchScalarGridSpec(
            num_scalar_prefetch=0,
            grid=grid,
            in_specs=[
                pl.BlockSpec((bm, bk), lambda i, j, k: (i, k)),
                pl.BlockSpec((bk, bn), lambda i, j, k: (k, j)),
                pl.BlockSpec((1, bn), lambda i, j, k: (0, j)),
            ],
            out_specs=pl.BlockSpec((bm, bn), lambda i, j, k: (i, j)),
            scratch_shapes=[pltpu.VMEM((bm, bn), jnp.float32)],
        ),
        compiler_params=pltpu.CompilerParams(
            dimension_semantics=("parallel", "parallel", "arbitrary"),
            vmem_limit_bytes=32 * 1024 * 1024,
        ),
    )(x2d, w, b)


# ---------------------------------------------------------------------------
# Full MLP forward pass.
# ---------------------------------------------------------------------------
def mlp_forward(x, w_fc, b_fc, w_proj, b_proj, *,
                block_m=256, block_n=512, block_k=512):
    """x: (B, T, C); w_fc: (C, 4C); b_fc: (1, 4C); w_proj: (4C, C); b_proj: (1, C)."""
    B, T, C = x.shape
    x2d = x.reshape(B * T, C)                      # free (contiguous) reshape

    # c_fc + fused exact GELU epilogue -> one HBM round trip for the hidden.
    h = linear(x2d, w_fc, b_fc, activation=_gelu_exact,
               block_m=block_m, block_n=block_n, block_k=block_k)

    # c_proj.  Dropout is identity in eval mode.
    # TODO(synk): train-mode dropout (PRNG masking) intentionally not implemented.
    y = linear(h, w_proj, b_proj, activation=None,
               block_m=block_m, block_n=block_n, block_k=block_k)

    return y.reshape(B, T, C)


# ---------------------------------------------------------------------------
# Pure-JAX reference (exact erf GELU, full-precision matmuls) for verification.
# ---------------------------------------------------------------------------
def _ref_forward(x, w_fc, b_fc, w_proj, b_proj):
    from jax.scipy.special import erf
    hp = jax.lax.Precision.HIGHEST
    h = jnp.dot(x, w_fc, precision=hp) + b_fc[0]
    h = 0.5 * h * (1.0 + erf(h * 0.7071067811865476))
    return jnp.dot(h, w_proj, precision=hp) + b_proj[0]


if __name__ == "__main__":
    # Small config consistent with the module: n_embd=64, hidden=4*n_embd.
    B, T, C = 2, 16, 64
    H = 4 * C

    key = jax.random.PRNGKey(0)
    kx, k1, k2, k3, k4 = jax.random.split(key, 5)

    x = jax.random.normal(kx, (B, T, C), dtype=jnp.float32)
    # Parameters stored as (in, out) = W.T of the PyTorch layout.
    w_fc = jax.random.normal(k1, (C, H), dtype=jnp.float32) * 0.02
    b_fc = jax.random.normal(k2, (1, H), dtype=jnp.float32) * 0.02
    w_proj = jax.random.normal(k3, (H, C), dtype=jnp.float32) * 0.02
    b_proj = jax.random.normal(k4, (1, C), dtype=jnp.float32) * 0.02

    # Small tiles here so the multi-step grid + K-accumulation path is exercised.
    out = mlp_forward(x, w_fc, b_fc, w_proj, b_proj,
                      block_m=16, block_n=128, block_k=128)
    out = jax.block_until_ready(out)

    ref = _ref_forward(x, w_fc, b_fc, w_proj, b_proj)
    assert out.shape == (B, T, C)
    max_err = float(jnp.max(jnp.abs(out - ref)))
    assert jnp.allclose(out, ref, atol=1e-4, rtol=1e-4), (
        f"mismatch vs reference (max abs err {max_err})")

    print("KERNEL_OK")
</pallas_src>

<mosaic_0001>
module attributes {stable_mosaic.version = 11 : i64} {
  func.func @kernel(%arg0: i32, %arg1: i32, %arg2: i32, %arg3: memref<16x64xf32, #tpu.memory_space<vmem>>, %arg4: memref<64x128xf32, #tpu.memory_space<vmem>>, %arg5: memref<1x128xf32, #tpu.memory_space<vmem>>, %arg6: memref<16x128xf32, #tpu.memory_space<vmem>>, %arg7: memref<16x128xf32, #tpu.memory_space<vmem>>) attributes {dimension_semantics = [#tpu.dimension_semantics<parallel>, #tpu.dimension_semantics<parallel>, #tpu.dimension_semantics<arbitrary>], iteration_bounds = array<i64: 2, 2, 1>, scalar_prefetch = 0 : i64, scratch_operands = 1 : i64, tpu.core_type = #tpu.core_type<tc>, window_params = [{transform_indices = @transform_0, window_bounds = array<i64: 16, 64>}, {transform_indices = @transform_1, window_bounds = array<i64: 64, 128>}, {transform_indices = @transform_2, window_bounds = array<i64: 1, 128>}, {transform_indices = @transform_3, window_bounds = array<i64: 16, 128>}]} {
    %c0_i32 = arith.constant 0 : i32
    %0 = arith.cmpi eq, %arg2, %c0_i32 : i32
    %1 = arith.extui %0 : i1 to i32
    %c0_i32_0 = arith.constant 0 : i32
    %2 = arith.cmpi ne, %1, %c0_i32_0 : i32
    scf.if %2 {
      %cst_10 = arith.constant 0.000000e+00 : f32
      %12 = vector.broadcast %cst_10 : f32 to vector<16x128xf32>
      %c0_11 = arith.constant 0 : index
      %c0_12 = arith.constant 0 : index
      %13 = vector.load %arg7[%c0_11, %c0_12] : memref<16x128xf32, #tpu.memory_space<vmem>>, vector<16x128xf32>
      tpu.vector_store %arg7[%c0_11, %c0_12], %12 {strides = array<i32>} : memref<16x128xf32, #tpu.memory_space<vmem>>, vector<16x128xf32>,
    } else {
    }
    %c0 = arith.constant 0 : index
    %c0_1 = arith.constant 0 : index
    %3 = vector.load %arg7[%c0, %c0_1] : memref<16x128xf32, #tpu.memory_space<vmem>>, vector<16x128xf32>
    %c0_2 = arith.constant 0 : index
    %c0_3 = arith.constant 0 : index
    %4 = vector.load %arg3[%c0_2, %c0_3] : memref<16x64xf32, #tpu.memory_space<vmem>>, vector<16x64xf32>
    %c0_4 = arith.constant 0 : index
    %c0_5 = arith.constant 0 : index
    %5 = vector.load %arg4[%c0_4, %c0_5] : memref<64x128xf32, #tpu.memory_space<vmem>>, vector<64x128xf32>
    %cst = arith.constant dense<0.000000e+00> : vector<16x128xf32>
    %6 = tpu.matmul %4, %5, %cst {dimension_numbers = #tpu.dot_dimension_numbers<[1], [0], [0], [1], [0, 0, 1, 1], [], []>} : vector<16x64xf32>, vector<64x128xf32>, vector<16x128xf32> -> vector<16x128xf32>
    %7 = arith.addf %3, %6 : vector<16x128xf32>
    %c0_6 = arith.constant 0 : index
    %c0_7 = arith.constant 0 : index
    %8 = vector.load %arg7[%c0_6, %c0_7] : memref<16x128xf32, #tpu.memory_space<vmem>>, vector<16x128xf32>
    tpu.vector_store %arg7[%c0_6, %c0_7], %7 {strides = array<i32>} : memref<16x128xf32, #tpu.memory_space<vmem>>, vector<16x128xf32>,
    %c0_i32_8 = arith.constant 0 : i32
    %9 = arith.cmpi eq, %arg2, %c0_i32_8 : i32
    %10 = arith.extui %9 : i1 to i32
    %c0_i32_9 = arith.constant 0 : i32
    %11 = arith.cmpi ne, %10, %c0_i32_9 : i32
    scf.if %11 {
      %c0_10 = arith.constant 0 : index
      %c0_11 = arith.constant 0 : index
      %12 = vector.load %arg7[%c0_10, %c0_11] : memref<16x128xf32, #tpu.memory_space<vmem>>, vector<16x128xf32>
      %c0_12 = arith.constant 0 : index
      %c0_13 = arith.constant 0 : index
      %13 = vector.load %arg5[%c0_12, %c0_13] : memref<1x128xf32, #tpu.memory_space<vmem>>, vector<1x128xf32>
      %14 = vector.broadcast %13 : vector<1x128xf32> to vector<16x128xf32>
      %15 = arith.addf %12, %14 : vector<16x128xf32>
      %cst_14 = arith.constant 0.707106769 : f32
      %16 = vector.broadcast %cst_14 : f32 to vector<16x128xf32>
      %17 = arith.mulf %15, %16 : vector<16x128xf32>
      %18 = math.absf %17 : vector<16x128xf32>
      %cst_15 = arith.constant 0.327591091 : f32
      %19 = vector.broadcast %cst_15 : f32 to vector<16x128xf32>
      %20 = arith.mulf %19, %18 : vector<16x128xf32>
      %cst_16 = arith.constant 1.000000e+00 : f32
      %21 = vector.broadcast %cst_16 : f32 to vector<16x128xf32>
      %22 = arith.addf %21, %20 : vector<16x128xf32>
      %cst_17 = arith.constant 1.000000e+00 : f32
      %23 = vector.broadcast %cst_17 : f32 to vector<16x128xf32>
      %24 = arith.divf %23, %22 : vector<16x128xf32>
      %cst_18 = arith.constant 1.06140542 : f32
      %25 = vector.broadcast %cst_18 : f32 to vector<16x128xf32>
      %26 = arith.mulf %24, %25 : vector<16x128xf32>
      %cst_19 = arith.constant -1.45315206 : f32
      %27 = vector.broadcast %cst_19 : f32 to vector<16x128xf32>
      %28 = arith.addf %27, %26 : vector<16x128xf32>
      %29 = arith.mulf %24, %28 : vector<16x128xf32>
      %cst_20 = arith.constant 1.42141378 : f32
      %30 = vector.broadcast %cst_20 : f32 to vector<16x128xf32>
      %31 = arith.addf %30, %29 : vector<16x128xf32>
      %32 = arith.mulf %24, %31 : vector<16x128xf32>
      %cst_21 = arith.constant -0.284496725 : f32
      %33 = vector.broadcast %cst_21 : f32 to vector<16x128xf32>
      %34 = arith.addf %33, %32 : vector<16x128xf32>
      %35 = arith.mulf %24, %34 : vector<16x128xf32>
      %cst_22 = arith.constant 0.254829586 : f32
      %36 = vector.broadcast %cst_22 : f32 to vector<16x128xf32>
      %37 = arith.addf %36, %35 : vector<16x128xf32>
      %38 = arith.mulf %24, %37 : vector<16x128xf32>
      %cst_23 = arith.constant 0.000000e+00 : f32
      %39 = vector.broadcast %cst_23 : f32 to vector<16x128xf32>
      %40 = arith.subf %39, %18 : vector<16x128xf32>
      %41 = arith.mulf %40, %18 : vector<16x128xf32>
      %42 = math.exp %41 : vector<16x128xf32>
      %43 = arith.mulf %38, %42 : vector<16x128xf32>
      %cst_24 = arith.constant 1.000000e+00 : f32
      %44 = vector.broadcast %cst_24 : f32 to vector<16x128xf32>
      %45 = arith.subf %44, %43 : vector<16x128xf32>
      %cst_25 = arith.constant 0.000000e+00 : f32
      %46 = vector.broadcast %cst_25 : f32 to vector<16x128xf32>
      %47 = arith.cmpf olt, %17, %46 : vector<16x128xf32>
      %cst_26 = arith.constant 0.000000e+00 : f32
      %48 = vector.broadcast %cst_26 : f32 to vector<16x128xf32>
      %49 = arith.subf %48, %45 : vector<16x128xf32>
      %50 = arith.select %47, %49, %45 : vector<16x128xi1>, vector<16x128xf32>
      %cst_27 = arith.constant 5.000000e-01 : f32
      %51 = vector.broadcast %cst_27 : f32 to vector<16x128xf32>
      %52 = arith.mulf %51, %15 : vector<16x128xf32>
      %cst_28 = arith.constant 1.000000e+00 : f32
      %53 = vector.broadcast %cst_28 : f32 to vector<16x128xf32>
      %54 = arith.addf %53, %50 : vector<16x128xf32>
      %55 = arith.mulf %52, %54 : vector<16x128xf32>
      %c0_29 = arith.constant 0 : index
      %c0_30 = arith.constant 0 : index
      %56 = vector.load %arg6[%c0_29, %c0_30] : memref<16x128xf32, #tpu.memory_space<vmem>>, vector<16x128xf32>
      tpu.vector_store %arg6[%c0_29, %c0_30], %55 {strides = array<i32>} : memref<16x128xf32, #tpu.memory_space<vmem>>, vector<16x128xf32>,
    } else {
    }
    return
  }
  func.func @transform_0(%arg0: i32, %arg1: i32, %arg2: i32) -> (i32, i32) {
    %c0_i32 = arith.constant 0 : i32
    return %arg0, %arg2 : i32, i32
  }
  func.func @transform_1(%arg0: i32, %arg1: i32, %arg2: i32) -> (i32, i32) {
    %c0_i32 = arith.constant 0 : i32
    return %arg2, %arg1 : i32, i32
  }
  func.func @transform_2(%arg0: i32, %arg1: i32, %arg2: i32) -> (i32, i32) {
    %c0_i32 = arith.constant 0 : i32
    %c0_i32_0 = arith.constant 0 : i32
    return %c0_i32, %arg1 : i32, i32
  }
  func.func @transform_3(%arg0: i32, %arg1: i32, %arg2: i32) -> (i32, i32) {
    %c0_i32 = arith.constant 0 : i32
    return %arg0, %arg1 : i32, i32
  }
}

</mosaic_0001>

<llo_original>
// kernel: tpu_custom_call.1
$region0: #{tpu_custom_call.1}
  #allocation0 [shape = 'u32[]', space=smem, size = 0x4, offset = 0x4, fixed_abs, tag = 'smem constant byte address 0x4 - core index']
  #allocation1 [shape = 'u32[144,128]{1,0:T(1,128)}', space=vmem, size = 0x12000, scoped, tag = 'internal scratch']
  #allocation2 [shape = 'f32[16,128]{1,0:T(8,128)}', space=vmem, size = 0x2000, scoped, tag = 'scratch operand']
  %s0 = inlined_call_operand.hbm [shape: f32[32,64], index: 0, kind: input, shape index: {}]
  %s1 = inlined_call_operand.hbm [shape: f32[64,256], index: 1, kind: input, shape index: {}]
  %s2 = inlined_call_operand.vmem [shape: f32[1,256], index: 2, kind: input, shape index: {}]
  %s3 = inlined_call_operand.hbm [shape: f32[32,256], index: 3, kind: output, shape index: {}]
  %s4 = sld [smem:[#allocation0]]
  $region61: #{tpu_custom_call.1} parent=0
    _
  %s6 = ssub.s32 1, %s4
  %s7 = scalar_select 0, %s6, %s4
  $region1: #{tpu_custom_call.1} parent=0
    #allocation3 [shape = 'u8[16384]{0}', space=vmem, size = 0x4000, scoped, tag = 'input window, operand 0']
    #allocation4 [shape = 's32[2]{0}', space=sflag, size = 0x8, scoped, tag = 'scoped memory for tpu_custom_call.1']
    #allocation5 [shape = 's32[2]{0}', space=sflag, size = 0x8, scoped, tag = 'scoped memory for tpu_custom_call.1']
    #allocation6 [shape = 'u8[65536]{0}', space=vmem, size = 0x10000, scoped, tag = 'input window, operand 1']
    #allocation7 [shape = 's32[2]{0}', space=sflag, size = 0x8, scoped, tag = 'scoped memory for tpu_custom_call.1']
    #allocation8 [shape = 'u8[16384]{0}', space=vmem, size = 0x4000, scoped, tag = 'output window, operand 0']
    %8 = vsyncpa [#allocation4], 0
    %s9 = scalar_lea.sflag [#allocation4], 1
    %10 = vsyncpa %s9, 0
    %11 = vsyncpa [#allocation7], 0
    %s12 = scalar_lea.sflag [#allocation7], 1
    %13 = vsyncpa %s12, 0
    %14 = vsyncpa [#allocation5], 0
    %s15 = scalar_lea.sflag [#allocation5], 1
    %16 = vsyncpa %s15, 0
    loop: start=0, step=1, limit=6
    $region2: #{tpu_custom_call.1} parent=1 // loop_pre_header
      _
    $region3: #{tpu_custom_call.1} parent=1 // loop_header
      %s18 = sphi 0, %s22
      %p19 = scmp.ge.s32.totalorder %s18, 6
      %s25 = sphi 0, %s44
      %s26 = sphi 0, %s40
      %s27 = sphi 0, %s36
      %s28 = sphi 0, %s25
      %s29 = sphi 0, %s26
      %s30 = sphi 0, %s27
      %s31 = sphi 0, %s28
      %s32 = sphi 0, %s29
      %s33 = sphi 0, %s30
      %s49 = sphi 0, %s51
      %s52 = sphi 0, %s49
      %s53 = sphi 0, %s52
      %s69 = sphi 0, %s53
      %s77 = sphi 0, %s79
      %s80 = sphi 0, %s77
      %s81 = sphi 0, %s80
      %s97 = sphi 0, %s81
      %s103 = sphi 0, %s105
      %s106 = sphi 0, %s103
      %s107 = sphi 0, %s106
      %s123 = sphi 0, %s107
      %s131 = sphi 0, %s133
      %s134 = sphi 0, %s131
      %s135 = sphi 0, %s134
      %s151 = sphi 0, %s135
    $region4: #{tpu_custom_call.1} parent=1 // loop_header_branch
      %21 = sbr.rel (%p19) target = $region8
    $region5: #{tpu_custom_call.1} parent=1 // loop_body
      %s23 = ssub.s32 %s18, 1
      %s24 = ssub.s32 %s18, 2
      %s34 = sadd.s32 1, %s27
      %p35 = scmp.ge.s32.totalorder %s34, 1
      %s36 = scalar_select %p35, 0, %s34
      %s37 = sadd.s32 1, %s26
      %s38 = scalar_select %p35, %s37, %s26
      %p39 = scmp.ge.s32.totalorder %s38, 2
      %s40 = scalar_select %p39, 0, %s38
      %s41 = sadd.s32 1, %s25
      %s42 = scalar_select %p39, %s41, %s25
      %p43 = scmp.ge.s32.totalorder %s42, 2
      %s44 = scalar_select %p43, 0, %s42
      %s45 = ssub.s32 %s25, %s44
      %s46 = ssub.s32 %s27, %s36
      %s47 = sor.u32 %s45, %s46
      %p48 = scmp.eq.s32.totalorder %s47, 0
      %s50 = sadd.s32 %s49, 1
      %s51 = scalar_select %p48, %s49, %s50
      %p54 = pneg %p48
      %p55 = scmp.eq.s32.totalorder %s18, 3
      %p56 = por %p54, %p55
      %p57 = scmp.ne.s32.totalorder %s49, %s52
      %p58 = scmp.eq.s32.totalorder %s18, 0
      %p59 = por %p57, %p58
      %p60 = scmp.ne.s32.totalorder %s49, %s52
      %p61 = scmp.eq.s32.totalorder %s23, 3
      %p62 = por %p60, %p61
      %p63 = scmp.ne.s32.totalorder %s52, %s53
      %p64 = scmp.eq.s32.totalorder %s23, 0
      %p65 = por %p63, %p64
      %p66 = scmp.ne.s32.totalorder %s52, %s53
      %p67 = scmp.eq.s32.totalorder %s24, 3
      %p68 = por %p66, %p67
      %p70 = scmp.ne.s32.totalorder %s53, %s69
      %p71 = scmp.eq.s32.totalorder %s24, 0
      %p72 = por %p70, %p71
      %s73 = ssub.s32 %s27, %s36
      %s74 = ssub.s32 %s26, %s40
      %s75 = sor.u32 %s73, %s74
      %p76 = scmp.eq.s32.totalorder %s75, 0
      %s78 = sadd.s32 %s77, 1
      %s79 = scalar_select %p76, %s77, %s78
      %p82 = pneg %p76
      %p83 = scmp.eq.s32.totalorder %s18, 3
      %p84 = por %p82, %p83
      %p85 = scmp.ne.s32.totalorder %s77, %s80
      %p86 = scmp.eq.s32.totalorder %s18, 0
      %p87 = por %p85, %p86
      %p88 = scmp.ne.s32.totalorder %s77, %s80
      %p89 = scmp.eq.s32.totalorder %s23, 3
      %p90 = por %p88, %p89
      %p91 = scmp.ne.s32.totalorder %s80, %s81
      %p92 = scmp.eq.s32.totalorder %s23, 0
      %p93 = por %p91, %p92
      %p94 = scmp.ne.s32.totalorder %s80, %s81
      %p95 = scmp.eq.s32.totalorder %s24, 3
      %p96 = por %p94, %p95
      %p98 = scmp.ne.s32.totalorder %s81, %s97
      %p99 = scmp.eq.s32.totalorder %s24, 0
      %p100 = por %p98, %p99
      %s101 = ssub.s32 %s26, %s40
      %p102 = scmp.eq.s32.totalorder %s101, 0
      %s104 = sadd.s32 %s103, 1
      %s105 = scalar_select %p102, %s103, %s104
      %p108 = pneg %p102
      %p109 = scmp.eq.s32.totalorder %s18, 3
      %p110 = por %p108, %p109
      %p111 = scmp.ne.s32.totalorder %s103, %s106
      %p112 = scmp.eq.s32.totalorder %s18, 0
      %p113 = por %p111, %p112
      %p114 = scmp.ne.s32.totalorder %s103, %s106
      %p115 = scmp.eq.s32.totalorder %s23, 3
      %p116 = por %p114, %p115
      %p117 = scmp.ne.s32.totalorder %s106, %s107
      %p118 = scmp.eq.s32.totalorder %s23, 0
      %p119 = por %p117, %p118
      %p120 = scmp.ne.s32.totalorder %s106, %s107
      %p121 = scmp.eq.s32.totalorder %s24, 3
      %p122 = por %p120, %p121
      %p124 = scmp.ne.s32.totalorder %s107, %s123
      %p125 = scmp.eq.s32.totalorder %s24, 0
      %p126 = por %p124, %p125
      %s127 = ssub.s32 %s25, %s44
      %s128 = ssub.s32 %s26, %s40
      %s129 = sor.u32 %s127, %s128
      %p130 = scmp.eq.s32.totalorder %s129, 0
      %s132 = sadd.s32 %s131, 1
      %s133 = scalar_select %p130, %s131, %s132
      %p136 = pneg %p130
      %p137 = scmp.eq.s32.totalorder %s18, 3
      %p138 = por %p136, %p137
      %p139 = scmp.ne.s32.totalorder %s131, %s134
      %p140 = scmp.eq.s32.totalorder %s18, 0
      %p141 = por %p139, %p140
      %p142 = scmp.ne.s32.totalorder %s131, %s134
      %p143 = scmp.eq.s32.totalorder %s23, 3
      %p144 = por %p142, %p143
      %p145 = scmp.ne.s32.totalorder %s134, %s135
      %p146 = scmp.eq.s32.totalorder %s23, 0
      %p147 = por %p145, %p146
      %p148 = scmp.ne.s32.totalorder %s134, %s135
      %p149 = scmp.eq.s32.totalorder %s24, 3
      %p150 = por %p148, %p149
      %p152 = scmp.ne.s32.totalorder %s135, %s151
      %p153 = scmp.eq.s32.totalorder %s24, 0
      %p154 = por %p152, %p153
      %p155 = scmp.le.s32.totalorder 1, %s18
      %p156 = scmp.lt.s32.totalorder %s18, 5
      %p157 = pnand %p155, %p156
      %p158 = pneg %p157
      // Predicated region
      $region9: #{tpu_custom_call.1} parent=5 // pred_check
        _
      $region10: #{tpu_custom_call.1} parent=5 // pred_check_branch
        %160 = sbr.rel (%p157) target = $region12
      $region11: #{tpu_custom_call.1} parent=5 // pred_region
        %s161 = ssub.s32 %s18, 1
      $region12: #{tpu_custom_call.1} parent=5 // pred_fallthru
        _
      %p162 = scmp.lt.s32.totalorder %s18, 4
      // Predicated region
      $region13: #{tpu_custom_call.1} parent=5 // pred_check
        %p163 = pneg %p162
      $region14: #{tpu_custom_call.1} parent=5 // pred_check_branch
        %165 = sbr.rel (%p163) target = $region16
      $region15: #{tpu_custom_call.1} parent=5 // pred_region
        // Predicated region
        $region17: #{tpu_custom_call.1} parent=15 // pred_check
          %p166 = pneg %p59
        $region18: #{tpu_custom_call.1} parent=15 // pred_check_branch
          %168 = sbr.rel (%p166) target = $region20
        $region19: #{tpu_custom_call.1} parent=15 // pred_region
          %s169 = sand.u32 %s49, 1
          %s170 = scalar_lea.sflag [#allocation4], %s169
          %s171 = sand.u32 %s49, 1
          %s172 = smul.addr %s171, 16
          %s173 = scalar_lea.vmem [#allocation3], %s172
          %s174 = smul.u32 2, %s25
          %s176 = ssub.s32 256, 256
          %177 = vsyncadd %s170, %s176
          %s178 = sadd.s32 %s27, %s174
          %s179 = smul.addr %s178, 128
          %s180 = scalar_lea.hbm %s0, %s179
          %s181 = sshll.u32 %s173, 4
          %s182 = int_to_ptr.vmem [resolvable:$true] %s181
          %187 = dma.hbm_to_vmem [thread:$0]  %s180, 256, %s182, %s170, 128, 128, 8
        $region20: #{tpu_custom_call.1} parent=15 // pred_fallthru
          _
        // Predicated region
        $region21: #{tpu_custom_call.1} parent=15 // pred_check
          %p188 = pneg %p87
        $region22: #{tpu_custom_call.1} parent=15 // pred_check_branch
          %190 = sbr.rel (%p188) target = $region24
        $region23: #{tpu_custom_call.1} parent=15 // pred_region
          %s191 = sand.u32 %s77, 1
          %s192 = scalar_lea.sflag [#allocation7], %s191
          %s193 = sand.u32 %s77, 1
          %s194 = smul.addr %s193, 64
          %s195 = scalar_lea.vmem [#allocation6], %s194
          %s196 = smul.u32 8, %s27
          %s198 = ssub.s32 1024, 1024
          %199 = vsyncadd %s192, %s198
          %s200 = smul.addr %s196, 2
          %s201 = sadd.s32 %s26, %s200
          %s202 = smul.addr %s201, 128
          %s203 = scalar_lea.hbm %s1, %s202
          %s204 = sshll.u32 %s195, 4
          %s205 = int_to_ptr.vmem [resolvable:$true] %s204
          %210 = dma.hbm_to_vmem [thread:$0]  %s203, 1024, %s205, %s192, 256, 128, 8
        $region24: #{tpu_custom_call.1} parent=15 // pred_fallthru
          _
        // Predicated region
        $region25: #{tpu_custom_call.1} parent=15 // pred_check
          %p211 = pneg %p113
        $region26: #{tpu_custom_call.1} parent=15 // pred_check_branch
          %213 = sbr.rel (%p211) target = $region28
        $region27: #{tpu_custom_call.1} parent=15 // pred_region
          %p214 = scmp.lt.s32.totalorder %s26, 1
          %s215 = scalar_select %p214, %s26, 1
          %s216 = scalar_lea.vmem %s2, %s215
        $region28: #{tpu_custom_call.1} parent=15 // pred_fallthru
          _
      $region16: #{tpu_custom_call.1} parent=5 // pred_fallthru
        _
      %p217 = scmp.le.s32.totalorder 1, %s18
      %p218 = scmp.lt.s32.totalorder %s18, 5
      %p219 = pnand %p217, %p218
      %p220 = pneg %p219
      // Predicated region
      $region29: #{tpu_custom_call.1} parent=5 // pred_check
        _
      $region30: #{tpu_custom_call.1} parent=5 // pred_check_branch
        %222 = sbr.rel (%p219) target = $region32
      $region31: #{tpu_custom_call.1} parent=5 // pred_region
        %s223 = ssub.s32 %s18, 1
        %s224 = sand.u32 %s52, 1
        %s225 = scalar_lea.sflag [#allocation4], %s224
        %s226 = sand.u32 %s52, 1
        %s227 = smul.addr %s226, 16
        %s228 = scalar_lea.vmem [#allocation3], %s227
        // Predicated region
        $region33: #{tpu_custom_call.1} parent=31 // pred_check
          %p229 = pneg %p65
        $region34: #{tpu_custom_call.1} parent=31 // pred_check_branch
          %231 = sbr.rel (%p229) target = $region36
        $region35: #{tpu_custom_call.1} parent=31 // pred_region
          %232 = dma.done %s225, 256
        $region36: #{tpu_custom_call.1} parent=31 // pred_fallthru
          _
        %s233 = sand.u32 %s80, 1
        %s234 = scalar_lea.sflag [#allocation7], %s233
        %s235 = sand.u32 %s80, 1
        %s236 = smul.addr %s235, 64
        %s237 = scalar_lea.vmem [#allocation6], %s236
        // Predicated region
        $region37: #{tpu_custom_call.1} parent=31 // pred_check
          %p238 = pneg %p93
        $region38: #{tpu_custom_call.1} parent=31 // pred_check_branch
          %240 = sbr.rel (%p238) target = $region40
        $region39: #{tpu_custom_call.1} parent=31 // pred_region
          %241 = dma.done %s234, 1024
        $region40: #{tpu_custom_call.1} parent=31 // pred_fallthru
          _
        %s242 = sand.u32 %s52, 1
        %s243 = scalar_lea.sflag [#allocation4], %s242
        %s244 = sand.u32 %s52, 1
        %s245 = smul.addr %s244, 16
        %s246 = scalar_lea.vmem [#allocation3], %s245
        %p247 = pneg %p65
        %p248 = pneg %p62
        %s249 = sand.u32 %s80, 1
        %s250 = scalar_lea.sflag [#allocation7], %s249
        %s251 = sand.u32 %s80, 1
        %s252 = smul.addr %s251, 64
        %s253 = scalar_lea.vmem [#allocation6], %s252
        %p254 = pneg %p93
        %p255 = pneg %p90
        %p256 = scmp.lt.s32.totalorder %s29, 1
        %s257 = scalar_select %p256, %s29, 1
        %s258 = scalar_lea.vmem %s2, %s257
        %p259 = pneg %p119
        %p260 = pneg %p116
        %p261 = pneg %p147
        %p262 = pneg %p144
        %s263 = sand.u32 %s134, 1
        %s264 = scalar_lea.sflag [#allocation5], %s263
        %s265 = sand.u32 %s134, 1
        %s266 = smul.addr %s265, 16
        %s267 = scalar_lea.vmem [#allocation8], %s266
        %s268 = smul.u32 2, %s28
        %s269 = smul.u32 8, %s30
        %p270 = scmp.lt.s32.totalorder %s29, 1
        %s271 = scalar_select %p270, %s29, 1
        %s272 = scalar_lea.vmem %s2, %s271
        %s273 = smul.u32 2, %s28
        %p274 = scmp.eq.s32.totalorder %s30, 0
        // Predicated region
        $region41: #{tpu_custom_call.1} parent=31 // pred_check
          %p275 = pneg %p274
        $region42: #{tpu_custom_call.1} parent=31 // pred_check_branch
          %277 = sbr.rel (%p275) target = $region44
        $region43: #{tpu_custom_call.1} parent=31 // pred_region
          %278 = vst [vmem:[#allocation2] sm:$0xff] 0.0
          %279 = vst [vmem:[#allocation2 + $0x8] sm:$0xff] 0.0
        $region44: #{tpu_custom_call.1} parent=31 // pred_fallthru
          _
        %v280 = vld [vmem:[#allocation2] sm:$0xff]
        %v281 = vld [vmem:[#allocation2 + $0x8] sm:$0xff]
        %v282 = vld [vmem:[%s228] sm:$0xff]
        %v283 = vld [vmem:[%s228 + $0x8] sm:$0xff]
        %v284 = vld [vmem:[%s237] sm:$0xff]
        %v285 = vld [vmem:[%s237 + $0x8] sm:$0xff]
        %v286 = vld [vmem:[%s237 + $0x10] sm:$0xff]
        %v287 = vld [vmem:[%s237 + $0x18] sm:$0xff]
        %v288 = vld [vmem:[%s237 + $0x20] sm:$0xff]
        %v289 = vld [vmem:[%s237 + $0x28] sm:$0xff]
        %v290 = vld [vmem:[%s237 + $0x30] sm:$0xff]
        %v291 = vld [vmem:[%s237 + $0x38] sm:$0xff]
        %vm292 = vcmask 523264
        %v294 = vsel %vm292, %v282, 0
        %v297 = vsel %vm292, %v283, 0
        %299 = vmatprep.subr.mxu0 0.0
        %300 = vmatpush1.msra.mxu0 %v284
        %301 = vmatprep.subr.mxu0 0.0
        %302 = vmatpush1.msra.mxu0 %v285
        %303 = vmatprep.subr.mxu0 0.0
        %304 = vmatpush1.msra.mxu0 %v286
        %305 = vmatprep.subr.mxu0 0.0
        %306 = vmatpush1.msra.mxu0 %v287
        %307 = vmatprep.subr.mxu0 0.0
        %308 = vmatpush1.msra.mxu0 %v288
        %309 = vmatprep.subr.mxu0 0.0
        %310 = vmatpush1.msra.mxu0 %v289
        %311 = vmatprep.subr.mxu0 0.0
        %312 = vmatpush1.msra.mxu0 %v290
        %313 = vmatprep.subr.mxu0 0.0
        %314 = vmatpush1.msra.mxu0 %v291
        %315 = vmatprep.subr.mxu0 0.0
        %316 = vmatpush1.msra.mxu0 0.0
        %317 = vmatprep.subr.mxu0 0.0
        %318 = vmatpush1.msra.mxu0 0.0
        %319 = vmatprep.subr.mxu0 0.0
        %320 = vmatpush1.msra.mxu0 0.0
        %321 = vmatprep.subr.mxu0 0.0
        %322 = vmatpush1.msra.mxu0 0.0
        %323 = vmatprep.subr.mxu0 0.0
        %324 = vmatpush1.msra.mxu0 0.0
        %325 = vmatprep.subr.mxu0 0.0
        %326 = vmatpush1.msra.mxu0 0.0
        %327 = vmatprep.subr.mxu0 0.0
        %328 = vmatpush1.msra.mxu0 0.0
        %329 = vmatprep.subr.mxu0 0.0
        %330 = vmatpush1.msra.mxu0 0.0
        %331 = vmatprep.subr.mxu0 0.0
        %332 = vmatpush1.msra.mxu0 0.0
        %333 = vmatprep.subr.mxu0 0.0
        %334 = vmatpush1.msra.mxu0 0.0
        %335 = vmatprep.subr.mxu0 0.0
        %336 = vmatpush1.msra.mxu0 0.0
        %337 = vmatprep.subr.mxu0 0.0
        %338 = vmatpush1.msra.mxu0 0.0
        %339 = vmatprep.subr.mxu0 0.0
        %340 = vmatpush1.msra.mxu0 0.0
        %341 = vmatprep.subr.mxu0 0.0
        %342 = vmatpush1.msra.mxu0 0.0
        %343 = vmatprep.subr.mxu0 0.0
        %344 = vmatpush1.msra.mxu0 0.0
        %345 = vmatprep.subr.mxu0 0.0
        %346 = vmatpush1.msra.mxu0 0.0
        %347 = vmatprep.subr.mxu0 0.0
        %348 = vmatpush1.msra.mxu0 0.0
        %349 = vmatprep.subr.mxu0 0.0
        %350 = vmatpush1.msra.mxu0 0.0
        %351 = vmatprep.subr.mxu0 0.0
        %352 = vmatpush1.msra.mxu0 0.0
        %353 = vmatprep.subr.mxu0 0.0
        %354 = vmatpush1.msra.mxu0 0.0
        %355 = vmatprep.subr.mxu0 0.0
        %356 = vmatpush1.msra.mxu0 0.0
        %357 = vmatprep.subr.mxu0 0.0
        %358 = vmatpush1.msra.mxu0 0.0
        %359 = vmatprep.subr.mxu0 0.0
        %360 = vmatpush1.msra.mxu0 0.0
        %361 = vmatprep.subr.mxu0 0.0
        %362 = vmatpush1.msra.mxu0 0.0
        %363 = vmatprep.mubr.f32.mxu0 0.0
        %364 = vmatmul.mubr.f32.gmra.mrb[0].mxu0 %v294
        %v365 = vpop.f32.mrb[0].mxu0
        %v366 = vadd.f32 0.0, %v365
        %v367 = vpop.f32.mrb[0].mxu0
        %368 = vmatprep.mubr.f32.mxu0 0.0
        %369 = vmatmul.mubr.f32.gmra.mrb[0].mxu0 %v297
        %v370 = vpop.f32.mrb[0].mxu0
        %v371 = vadd.f32 0.0, %v370
        %v372 = vpop.f32.mrb[0].mxu0
        %373 = vdwg.mxu0
        %v374 = vadd.f32 %v280, %v366
        %v375 = vadd.f32 %v281, %v371
        %376 = vst [vmem:[#allocation2] sm:$0xff] %v374
        %377 = vst [vmem:[#allocation2 + $0x8] sm:$0xff] %v375
        // Predicated region
        $region45: #{tpu_custom_call.1} parent=31 // pred_check
          %p378 = pneg %p274
        $region46: #{tpu_custom_call.1} parent=31 // pred_check_branch
          %380 = sbr.rel (%p378) target = $region48
        $region47: #{tpu_custom_call.1} parent=31 // pred_region
          %v381 = vld [vmem:[#allocation2] sm:$0xff]
          %v382 = vld [vmem:[#allocation2 + $0x8] sm:$0xff]
          %v383 = vld [vmem:[%s272] sm:$0x1]
          %v385 = vlaneseq
          %v386 = vshrl.u32 %v385, 7
          %v387 = vsub.s32 0, %v386
          %v388 = vrot.slane %v383, %v387
          %v390 = vadd.f32 %v381, %v388
          %v391 = vadd.f32 %v382, %v388
          %v392 = vmul.f32 %v390, 0.70710677
          %v393 = vmul.f32 %v391, 0.70710677
          %v394 = vand.u32 2147483647, %v392
          %v395 = vand.u32 2147483647, %v393
          %v396 = vmul.f32 %v394, 0.3275911
          %v397 = vmul.f32 %v395, 0.3275911
          %v398 = vadd.f32 %v396, 1.0
          %v399 = vadd.f32 %v397, 1.0
          %v400 = vrcp.pop %v398
          %v401 = vmul.f32 1.0, %v400
          %v402 = vrcp.pop %v399
          %v403 = vmul.f32 1.0, %v402
          %v404 = vmul.f32 %v401, 1.0614054
          %v405 = vmul.f32 %v403, 1.0614054
          %v406 = vadd.f32 %v404, -1.4531521
          %v407 = vadd.f32 %v405, -1.4531521
          %v408 = vmul.f32 %v401, %v406
          %v409 = vmul.f32 %v403, %v407
          %v410 = vadd.f32 %v408, 1.4214138
          %v411 = vadd.f32 %v409, 1.4214138
          %v412 = vmul.f32 %v401, %v410
          %v413 = vmul.f32 %v403, %v411
          %v414 = vadd.f32 %v412, -0.28449672
          %v415 = vadd.f32 %v413, -0.28449672
          %v416 = vmul.f32 %v401, %v414
          %v417 = vmul.f32 %v403, %v415
          %v418 = vadd.f32 %v416, 0.2548296
          %v419 = vadd.f32 %v417, 0.2548296
          %v420 = vmul.f32 %v401, %v418
          %v421 = vmul.f32 %v403, %v419
          %v422 = vsub.f32 0.0, %v394
          %v423 = vsub.f32 0.0, %v395
          %v424 = vmul.f32 %v422, %v394
          %v425 = vmul.f32 %v423, %v395
          %v426 = vmul.f32 %v424, 1.442695
          %v427 = vpow.pop %v426
          %v428 = vmul.f32 %v425, 1.442695
          %v429 = vpow.pop %v428
          %v430 = vmul.f32 %v420, %v427
          %v431 = vmul.f32 %v421, %v429
          %v432 = vsub.f32 1.0, %v430
          %v433 = vsub.f32 1.0, %v431
          %vm434 = vcmp.lt.f32.partialorder %v392, 0.0
          %vm435 = vcmp.lt.f32.partialorder %v393, 0.0
          %v436 = vsub.f32 0.0, %v432
          %v437 = vsub.f32 0.0, %v433
          %v438 = vsel %vm434, %v436, %v432
          %v439 = vsel %vm435, %v437, %v433
          %v440 = vmul.f32 %v390, 0.5
          %v441 = vmul.f32 %v391, 0.5
          %v442 = vadd.f32 %v438, 1.0
          %v443 = vadd.f32 %v439, 1.0
          %v444 = vmul.f32 %v440, %v442
          %v445 = vmul.f32 %v441, %v443
          %446 = vst [vmem:[%s267] sm:$0xff] %v444
          %447 = vst [vmem:[%s267 + $0x8] sm:$0xff] %v445
        $region48: #{tpu_custom_call.1} parent=31 // pred_fallthru
          _
        %s448 = sand.u32 %s134, 1
        %s449 = scalar_lea.sflag [#allocation5], %s448
        %s450 = sand.u32 %s134, 1
        %s451 = smul.addr %s450, 16
        %s452 = scalar_lea.vmem [#allocation8], %s451
        // Predicated region
        $region49: #{tpu_custom_call.1} parent=31 // pred_check
          %p453 = pneg %p144
        $region50: #{tpu_custom_call.1} parent=31 // pred_check_branch
          %455 = sbr.rel (%p453) target = $region52
        $region51: #{tpu_custom_call.1} parent=31 // pred_region
          %s456 = smul.u32 2, %s28
          %s458 = ssub.s32 256, 256
          %459 = vsyncadd %s449, %s458
          %s460 = smul.addr %s456, 2
          %s461 = sadd.s32 %s29, %s460
          %s462 = smul.addr %s461, 128
          %s463 = scalar_lea.hbm %s3, %s462
          %s464 = sshll.u32 %s452, 4
          %s465 = int_to_ptr.vmem [resolvable:$true] %s464
          %470 = dma.vmem_to_hbm [thread:$0]  %s465, 256, %s463, %s449, 128, 256, 8
        $region52: #{tpu_custom_call.1} parent=31 // pred_fallthru
          _
      $region32: #{tpu_custom_call.1} parent=5 // pred_fallthru
        _
      %p471 = scmp.le.s32.totalorder 2, %s18
      // Predicated region
      $region53: #{tpu_custom_call.1} parent=5 // pred_check
        %p472 = pneg %p471
      $region54: #{tpu_custom_call.1} parent=5 // pred_check_branch
        %474 = sbr.rel (%p472) target = $region56
      $region55: #{tpu_custom_call.1} parent=5 // pred_region
        %s475 = ssub.s32 %s18, 2
        // Predicated region
        $region57: #{tpu_custom_call.1} parent=55 // pred_check
          %p476 = pneg %p150
        $region58: #{tpu_custom_call.1} parent=55 // pred_check_branch
          %478 = sbr.rel (%p476) target = $region60
        $region59: #{tpu_custom_call.1} parent=55 // pred_region
          %s479 = sand.u32 %s135, 1
          %s480 = scalar_lea.sflag [#allocation5], %s479
          %s481 = sand.u32 %s135, 1
          %s482 = smul.addr %s481, 16
          %s483 = scalar_lea.vmem [#allocation8], %s482
          %484 = dma.done %s480, 256
        $region60: #{tpu_custom_call.1} parent=55 // pred_fallthru
          _
      $region56: #{tpu_custom_call.1} parent=5 // pred_fallthru
        _
    $region6: #{tpu_custom_call.1} parent=1 // loop_footer
      %s22 = sadd.s32 1, %s18
    $region7: #{tpu_custom_call.1} parent=1 // loop_footer_branch
      %17 = sbr.rel target = $region3
    $region8: #{tpu_custom_call.1} parent=1 // loop_exit
      _
    %485 = vsyncpa [#allocation4], 1
    %s486 = scalar_lea.sflag [#allocation4], 1
    %487 = vsyncpa %s486, 1
    %488 = vsyncpa [#allocation7], 1
    %s489 = scalar_lea.sflag [#allocation7], 1
    %490 = vsyncpa %s489, 1
    %491 = vsyncpa [#allocation5], 1
    %s492 = scalar_lea.sflag [#allocation5], 1
    %493 = vsyncpa %s492, 1

</llo_original>
